<compile_context>
chip_gen: v7x
topology: tpu7x:2x2x1
jax: 0.10.0
libtpu: 0.0.40
codegen_flags: <defaults>
</compile_context>

<pallas_src>
import functools

import jax
import jax.numpy as jnp
from jax.experimental import pallas as pl
from jax.experimental.pallas import tpu as pltpu


def _cdiv(a, b):
    return (a + b - 1) // b


def _round_up(x, m):
    return ((x + m - 1) // m) * m


def _vmem_capacity_bytes():
    """Physical VMEM per TensorCore, with a conservative fallback."""
    try:
        info = pltpu.get_tpu_info()
        cap = int(getattr(info, "vmem_capacity_bytes"))
        if cap > 0:
            return cap
    except Exception:
        pass
    return 64 * 1024 * 1024          # v7x-sized fallback (most restrictive)


def stateaction_kernel(
    state_ref, action_ref,
    w_obs_ref, b_obs_ref,
    w_act_ref, b_act_ref,
    w_m1s_ref, w_m1a_ref, b_m1_ref,
    w_m2_ref, b_m2_ref,
    out_ref,
    *, compute_dtype, reduce_out,
):
    cdt = compute_dtype

    # observation_net: Linear + ReLU.  Streamed tile is cast to the MXU dtype
    # here (VPU cast, hidden under the tile DMA); accumulation stays f32.
    h_s = jnp.dot(state_ref[...].astype(cdt), w_obs_ref[...],
                  preferred_element_type=jnp.float32) + b_obs_ref[...]
    h_s = jnp.maximum(h_s, 0.0)

    # action_net: Linear + ReLU.
    h_a = jnp.dot(action_ref[...].astype(cdt), w_act_ref[...],
                  preferred_element_type=jnp.float32) + b_act_ref[...]
    h_a = jnp.maximum(h_a, 0.0)

    # main_net layer 1 on cat([h_s, h_a], dim=1), expressed as a split matmul
    # on the two pre-split weight halves (numerically identical, concat-free).
    h = (jnp.dot(h_s.astype(cdt), w_m1s_ref[...],
                 preferred_element_type=jnp.float32)
         + jnp.dot(h_a.astype(cdt), w_m1a_ref[...],
                   preferred_element_type=jnp.float32)
         + b_m1_ref[...])
    h = jnp.maximum(h, 0.0)

    # main_net layer 2 (no activation).
    if reduce_out:
        # out_dim == 1: VPU multiply + row reduction against w_m2^T (1, hid);
        # avoids a 1/128-lane-occupied MXU matmul.
        o = jnp.sum(h * w_m2_ref[...], axis=-1, keepdims=True) + b_m2_ref[...]
    else:
        o = jnp.dot(h.astype(cdt), w_m2_ref[...],
                    preferred_element_type=jnp.float32) + b_m2_ref[...]
    out_ref[...] = o.astype(out_ref.dtype)


def _choose_batch_tile(in_feats, act_feats, obs_out, act_out, main_hid, out_dim,
                       in_bpe, w_bpe, vmem_budget_bytes):
    """Largest batch tile whose full VMEM footprint fits the budget."""
    # Resident (DMA'd once): weights + biases.
    resident = ((in_feats * obs_out + act_feats * act_out
                 + (obs_out + act_out) * main_hid) * w_bpe
                + main_hid * out_dim * 4                       # w_m2 (f32 worst case)
                + (obs_out + act_out + main_hid + out_dim) * 4)  # biases, f32
    # Per-batch-row bytes: double-buffered streamed in/out tiles, f32
    # intermediates, plus their bf16 matmul-operand copies and the in-kernel
    # bf16 casts of the streamed tiles.
    per_row = (2 * (in_feats + act_feats) * in_bpe        # double-buffered inputs
               + 2 * out_dim * 4                          # double-buffered output
               + (obs_out + act_out + main_hid) * (4 + 2)  # f32 interm + bf16 copies
               + (in_feats + act_feats) * 2)              # bf16 casts of stream tiles
    avail = max(vmem_budget_bytes - resident, per_row * 8)
    tb = avail // per_row
    tb = min(tb, 4096)
    tb = max((tb // 16) * 16, 8)
    return tb


def state_action_net_forward(state, action, params, *,
                             compute_dtype=jnp.bfloat16, batch_tile=None):
    """Full StateActionNet feed-forward in one batch-tiled Pallas call."""
    B = state.shape[0]
    state_flat = state.reshape(B, -1)          # torch .view(B, -1) equivalent
    action_flat = action.reshape(B, -1)
    in_feats = state_flat.shape[1]
    act_feats = action_flat.shape[1]

    (w_obs, b_obs, w_act, b_act, w_m1, b_m1, w_m2, b_m2) = params
    obs_out = w_obs.shape[1]
    act_out = w_act.shape[1]
    main_hid = w_m1.shape[1]
    out_dim = w_m2.shape[1]

    # Weight prep (one-time, weights are DMA'd once per call): MXU operands in
    # the compute dtype; w_m1 pre-split into its state/action halves.
    w_obs_c = w_obs.astype(compute_dtype)
    w_act_c = w_act.astype(compute_dtype)
    w_m1_s = w_m1[:obs_out, :].astype(compute_dtype)
    w_m1_a = w_m1[obs_out:, :].astype(compute_dtype)
    reduce_out = (out_dim == 1)
    if reduce_out:
        w_m2_c = jnp.transpose(w_m2)           # (1, main_hid), stays f32 (VPU path)
    else:
        w_m2_c = w_m2.astype(compute_dtype)

    in_bpe = jnp.dtype(state_flat.dtype).itemsize
    w_bpe = jnp.dtype(compute_dtype).itemsize

    # VMEM budgeting against the actual device capacity (v7x: 64 MiB/TC).
    vmem_cap = _vmem_capacity_bytes()
    vmem_limit = min(int(vmem_cap * 0.75), 96 * 1024 * 1024)
    tile_budget = vmem_limit - 4 * 1024 * 1024   # headroom for internal scratch

    if batch_tile is not None:
        tb = max(int(batch_tile), 8)
    else:
        tb = _choose_batch_tile(in_feats, act_feats, obs_out, act_out,
                                main_hid, out_dim, in_bpe, w_bpe, tile_budget)

    if tb >= B:
        tb = B                                   # single full-array block
        num_steps = 1
    else:
        num_steps = _cdiv(B, tb)
        # v7x megacore: prefer an even step count so both TCs get equal work.
        if batch_tile is None and num_steps > 1 and num_steps % 2 == 1:
            tb_alt = max(_round_up(_cdiv(B, num_steps + 1), 16), 16)
            if tb_alt < B and _cdiv(B, tb_alt) % 2 == 0:
                tb = tb_alt
                num_steps = _cdiv(B, tb)

    grid = (num_steps,)

    flops = 2 * B * (in_feats * obs_out + act_feats * act_out
                     + (obs_out + act_out) * main_hid + main_hid * out_dim)
    weight_bytes = sum(int(x.size) * jnp.dtype(x.dtype).itemsize
                       for x in (w_obs_c, b_obs, w_act_c, b_act,
                                 w_m1_s, w_m1_a, b_m1, w_m2_c, b_m2))
    bytes_accessed = (B * in_feats * in_bpe + B * act_feats * in_bpe
                      + weight_bytes + B * out_dim * 4)

    kernel = functools.partial(stateaction_kernel,
                               compute_dtype=compute_dtype,
                               reduce_out=reduce_out)

    out = pl.pallas_call(
        kernel,
        out_shape=jax.ShapeDtypeStruct((B, out_dim), jnp.float32),
        grid_spec=pltpu.PrefetchScalarGridSpec(
            num_scalar_prefetch=0,
            grid=grid,
            in_specs=[
                # streamed per batch tile (original dtype; ragged last block OK)
                pl.BlockSpec((tb, in_feats), lambda i: (i, 0)),
                pl.BlockSpec((tb, act_feats), lambda i: (i, 0)),
                # VMEM-resident weights/biases: constant index maps -> DMA once
                pl.BlockSpec(w_obs_c.shape, lambda i: (0, 0)),
                pl.BlockSpec(b_obs.shape, lambda i: (0, 0)),
                pl.BlockSpec(w_act_c.shape, lambda i: (0, 0)),
                pl.BlockSpec(b_act.shape, lambda i: (0, 0)),
                pl.BlockSpec(w_m1_s.shape, lambda i: (0, 0)),
                pl.BlockSpec(w_m1_a.shape, lambda i: (0, 0)),
                pl.BlockSpec(b_m1.shape, lambda i: (0, 0)),
                pl.BlockSpec(w_m2_c.shape, lambda i: (0, 0)),
                pl.BlockSpec(b_m2.shape, lambda i: (0, 0)),
            ],
            out_specs=pl.BlockSpec((tb, out_dim), lambda i: (i, 0)),
        ),
        compiler_params=pltpu.CompilerParams(
            dimension_semantics=("parallel",),     # megacore sharding on v7x
            vmem_limit_bytes=vmem_limit,
        ),
        cost_estimate=pl.CostEstimate(
            flops=flops, transcendentals=0, bytes_accessed=bytes_accessed),
    )(state_flat, action_flat,
      w_obs_c, b_obs, w_act_c, b_act,
      w_m1_s, w_m1_a, b_m1, w_m2_c, b_m2)

    return out


def _reference_forward(state, action, params):
    (w_obs, b_obs, w_act, b_act, w_m1, b_m1, w_m2, b_m2) = params
    B = state.shape[0]
    s = state.reshape(B, -1)
    a = action.reshape(B, -1)
    hs = jnp.maximum(s @ w_obs + b_obs, 0.0)
    ha = jnp.maximum(a @ w_act + b_act, 0.0)
    x = jnp.concatenate([hs, ha], axis=1)
    h = jnp.maximum(x @ w_m1 + b_m1, 0.0)
    return h @ w_m2 + b_m2


if __name__ == "__main__":
    key = jax.random.PRNGKey(0)
    (k_state, k_action, k_state2, k_action2,
     k0, k1, k2, k3, k4) = jax.random.split(key, 9)

    # Small shapes consistent with the module's forward:
    B, C, H, W = 2, 4, 16, 16      # observation (NCHW)
    A = 6                          # action dim
    OBS_HID = 32                   # observation_net output
    ACT_HID = 32                   # action_net output
    MAIN_HID = 32                  # main_net hidden
    OUT = 1                        # critic-style scalar output

    state = jax.random.normal(k_state, (B, C, H, W), dtype=jnp.float32)
    action = jax.random.normal(k_action, (B, A), dtype=jnp.float32)

    in_feats = C * H * W

    def linear_params(k, fan_in, fan_out):
        kw, kb = jax.random.split(k)
        scale = 1.0 / jnp.sqrt(fan_in)
        w = jax.random.uniform(kw, (fan_in, fan_out), jnp.float32, -scale, scale)
        b = jax.random.uniform(kb, (1, fan_out), jnp.float32, -scale, scale)
        return w, b

    w_obs, b_obs = linear_params(k0, in_feats, OBS_HID)
    w_act, b_act = linear_params(k1, A, ACT_HID)
    w_m1, b_m1 = linear_params(k2, OBS_HID + ACT_HID, MAIN_HID)
    w_m2, b_m2 = linear_params(k3, MAIN_HID, OUT)

    params = (w_obs, b_obs, w_act, b_act, w_m1, b_m1, w_m2, b_m2)
    ref = _reference_forward(state, action, params)

    # 1) f32 path — tight check of the kernel logic (incl. VPU out_dim=1 path).
    out_f32 = jax.block_until_ready(
        state_action_net_forward(state, action, params, compute_dtype=jnp.float32))
    assert out_f32.shape == (B, OUT)
    assert jnp.allclose(out_f32, ref, atol=1e-4, rtol=1e-4)

    # 2) default bf16-matmul path — looser tolerance (bf16 MXU operands,
    #    f32 accumulation / elementwise).
    out_bf16 = jax.block_until_ready(state_action_net_forward(state, action, params))
    assert out_bf16.shape == (B, OUT)
    assert jnp.allclose(out_bf16, ref, atol=5e-2, rtol=5e-2)

    # 3) multi-step grid with a ragged last tile (no wrapper-side padding).
    B2 = 40
    state2 = jax.random.normal(k_state2, (B2, C, H, W), dtype=jnp.float32)
    action2 = jax.random.normal(k_action2, (B2, A), dtype=jnp.float32)
    out2 = jax.block_until_ready(
        state_action_net_forward(state2, action2, params,
                                 compute_dtype=jnp.float32, batch_tile=16))
    ref2 = _reference_forward(state2, action2, params)
    assert out2.shape == (B2, OUT)
    assert jnp.allclose(out2, ref2, atol=1e-4, rtol=1e-4)

    # 4) out_dim > 1 exercises the MXU final-layer path instead of the VPU
    #    reduction path.
    OUT2 = 8
    w_m2b, b_m2b = linear_params(k4, MAIN_HID, OUT2)
    params_b = (w_obs, b_obs, w_act, b_act, w_m1, b_m1, w_m2b, b_m2b)
    out3 = jax.block_until_ready(
        state_action_net_forward(state2, action2, params_b,
                                 compute_dtype=jnp.float32))
    ref3 = _reference_forward(state2, action2, params_b)
    assert out3.shape == (B2, OUT2)
    assert jnp.allclose(out3, ref3, atol=1e-4, rtol=1e-4)

    print("KERNEL_OK")
</pallas_src>

<mosaic_0001>
module attributes {stable_mosaic.version = 11 : i64} {
  func.func @stateaction_kernel(%arg0: i32, %arg1: memref<2x1024xf32, #tpu.memory_space<vmem>>, %arg2: memref<2x6xf32, #tpu.memory_space<vmem>>, %arg3: memref<1024x32xf32, #tpu.memory_space<vmem>>, %arg4: memref<1x32xf32, #tpu.memory_space<vmem>>, %arg5: memref<6x32xf32, #tpu.memory_space<vmem>>, %arg6: memref<1x32xf32, #tpu.memory_space<vmem>>, %arg7: memref<32x32xf32, #tpu.memory_space<vmem>>, %arg8: memref<32x32xf32, #tpu.memory_space<vmem>>, %arg9: memref<1x32xf32, #tpu.memory_space<vmem>>, %arg10: memref<1x32xf32, #tpu.memory_space<vmem>>, %arg11: memref<1x1xf32, #tpu.memory_space<vmem>>, %arg12: memref<2x1xf32, #tpu.memory_space<vmem>>) attributes {dimension_semantics = [#tpu.dimension_semantics<parallel>], iteration_bounds = array<i64: 1>, scalar_prefetch = 0 : i64, scratch_operands = 0 : i64, tpu.core_type = #tpu.core_type<tc>, window_params = [{transform_indices = @transform_0, window_bounds = array<i64: 2, 1024>}, {transform_indices = @transform_1, window_bounds = array<i64: 2, 6>}, {pipeline_mode = #tpu.pipeline_mode<synchronous>, transform_indices = @transform_2, window_bounds = array<i64: 1024, 32>}, {pipeline_mode = #tpu.pipeline_mode<synchronous>, transform_indices = @transform_3, window_bounds = array<i64: 1, 32>}, {pipeline_mode = #tpu.pipeline_mode<synchronous>, transform_indices = @transform_4, window_bounds = array<i64: 6, 32>}, {pipeline_mode = #tpu.pipeline_mode<synchronous>, transform_indices = @transform_5, window_bounds = array<i64: 1, 32>}, {pipeline_mode = #tpu.pipeline_mode<synchronous>, transform_indices = @transform_6, window_bounds = array<i64: 32, 32>}, {pipeline_mode = #tpu.pipeline_mode<synchronous>, transform_indices = @transform_7, window_bounds = array<i64: 32, 32>}, {pipeline_mode = #tpu.pipeline_mode<synchronous>, transform_indices = @transform_8, window_bounds = array<i64: 1, 32>}, {pipeline_mode = #tpu.pipeline_mode<synchronous>, transform_indices = @transform_9, window_bounds = array<i64: 1, 32>}, {pipeline_mode = #tpu.pipeline_mode<synchronous>, transform_indices = @transform_10, window_bounds = array<i64: 1, 1>}, {transform_indices = @transform_11, window_bounds = array<i64: 2, 1>}]} {
    %c0 = arith.constant 0 : index
    %c0_0 = arith.constant 0 : index
    %0 = vector.load %arg1[%c0, %c0_0] : memref<2x1024xf32, #tpu.memory_space<vmem>>, vector<2x1024xf32>
    %c0_1 = arith.constant 0 : index
    %c0_2 = arith.constant 0 : index
    %1 = vector.load %arg3[%c0_1, %c0_2] : memref<1024x32xf32, #tpu.memory_space<vmem>>, vector<1024x32xf32>
    %cst = arith.constant dense<0.000000e+00> : vector<2x32xf32>
    %2 = tpu.matmul %0, %1, %cst {dimension_numbers = #tpu.dot_dimension_numbers<[1], [0], [0], [1], [0, 0, 1, 1], [], []>} : vector<2x1024xf32>, vector<1024x32xf32>, vector<2x32xf32> -> vector<2x32xf32>
    %c0_3 = arith.constant 0 : index
    %c0_4 = arith.constant 0 : index
    %3 = vector.load %arg4[%c0_3, %c0_4] : memref<1x32xf32, #tpu.memory_space<vmem>>, vector<1x32xf32>
    %4 = vector.broadcast %3 : vector<1x32xf32> to vector<2x32xf32>
    %5 = arith.addf %2, %4 : vector<2x32xf32>
    %cst_5 = arith.constant 0.000000e+00 : f32
    %6 = vector.broadcast %cst_5 : f32 to vector<2x32xf32>
    %7 = arith.maximumf %5, %6 : vector<2x32xf32>
    %c0_6 = arith.constant 0 : index
    %c0_7 = arith.constant 0 : index
    %8 = vector.load %arg2[%c0_6, %c0_7] : memref<2x6xf32, #tpu.memory_space<vmem>>, vector<2x6xf32>
    %c0_8 = arith.constant 0 : index
    %c0_9 = arith.constant 0 : index
    %9 = vector.load %arg5[%c0_8, %c0_9] : memref<6x32xf32, #tpu.memory_space<vmem>>, vector<6x32xf32>
    %cst_10 = arith.constant dense<0.000000e+00> : vector<2x32xf32>
    %10 = tpu.matmul %8, %9, %cst_10 {dimension_numbers = #tpu.dot_dimension_numbers<[1], [0], [0], [1], [0, 0, 1, 1], [], []>} : vector<2x6xf32>, vector<6x32xf32>, vector<2x32xf32> -> vector<2x32xf32>
    %c0_11 = arith.constant 0 : index
    %c0_12 = arith.constant 0 : index
    %11 = vector.load %arg6[%c0_11, %c0_12] : memref<1x32xf32, #tpu.memory_space<vmem>>, vector<1x32xf32>
    %12 = vector.broadcast %11 : vector<1x32xf32> to vector<2x32xf32>
    %13 = arith.addf %10, %12 : vector<2x32xf32>
    %cst_13 = arith.constant 0.000000e+00 : f32
    %14 = vector.broadcast %cst_13 : f32 to vector<2x32xf32>
    %15 = arith.maximumf %13, %14 : vector<2x32xf32>
    %c0_14 = arith.constant 0 : index
    %c0_15 = arith.constant 0 : index
    %16 = vector.load %arg7[%c0_14, %c0_15] : memref<32x32xf32, #tpu.memory_space<vmem>>, vector<32x32xf32>
    %cst_16 = arith.constant dense<0.000000e+00> : vector<2x32xf32>
    %17 = tpu.matmul %7, %16, %cst_16 {dimension_numbers = #tpu.dot_dimension_numbers<[1], [0], [0], [1], [0, 0, 1, 1], [], []>} : vector<2x32xf32>, vector<32x32xf32>, vector<2x32xf32> -> vector<2x32xf32>
    %c0_17 = arith.constant 0 : index
    %c0_18 = arith.constant 0 : index
    %18 = vector.load %arg8[%c0_17, %c0_18] : memref<32x32xf32, #tpu.memory_space<vmem>>, vector<32x32xf32>
    %cst_19 = arith.constant dense<0.000000e+00> : vector<2x32xf32>
    %19 = tpu.matmul %15, %18, %cst_19 {dimension_numbers = #tpu.dot_dimension_numbers<[1], [0], [0], [1], [0, 0, 1, 1], [], []>} : vector<2x32xf32>, vector<32x32xf32>, vector<2x32xf32> -> vector<2x32xf32>
    %20 = arith.addf %17, %19 : vector<2x32xf32>
    %c0_20 = arith.constant 0 : index
    %c0_21 = arith.constant 0 : index
    %21 = vector.load %arg9[%c0_20, %c0_21] : memref<1x32xf32, #tpu.memory_space<vmem>>, vector<1x32xf32>
    %22 = vector.broadcast %21 : vector<1x32xf32> to vector<2x32xf32>
    %23 = arith.addf %20, %22 : vector<2x32xf32>
    %cst_22 = arith.constant 0.000000e+00 : f32
    %24 = vector.broadcast %cst_22 : f32 to vector<2x32xf32>
    %25 = arith.maximumf %23, %24 : vector<2x32xf32>
    %c0_23 = arith.constant 0 : index
    %c0_24 = arith.constant 0 : index
    %26 = vector.load %arg10[%c0_23, %c0_24] : memref<1x32xf32, #tpu.memory_space<vmem>>, vector<1x32xf32>
    %27 = vector.broadcast %26 : vector<1x32xf32> to vector<2x32xf32>
    %28 = arith.mulf %25, %27 : vector<2x32xf32>
    %cst_25 = arith.constant dense<0.000000e+00> : vector<2xf32>
    %29 = vector.multi_reduction <add>, %28, %cst_25 [1] : vector<2x32xf32> to vector<2xf32>
    %30 = vector.shape_cast %29 : vector<2xf32> to vector<2x1xf32>
    %c0_26 = arith.constant 0 : index
    %c0_27 = arith.constant 0 : index
    %31 = vector.load %arg11[%c0_26, %c0_27] : memref<1x1xf32, #tpu.memory_space<vmem>>, vector<1x1xf32>
    %32 = vector.broadcast %31 : vector<1x1xf32> to vector<2x1xf32>
    %33 = arith.addf %30, %32 : vector<2x1xf32>
    %c0_28 = arith.constant 0 : index
    %c0_29 = arith.constant 0 : index
    %34 = vector.load %arg12[%c0_28, %c0_29] : memref<2x1xf32, #tpu.memory_space<vmem>>, vector<2x1xf32>
    tpu.vector_store %arg12[%c0_28, %c0_29], %33 {strides = array<i32>} : memref<2x1xf32, #tpu.memory_space<vmem>>, vector<2x1xf32>,
    return
  }
  func.func @transform_0(%arg0: i32) -> (i32, i32) {
    %c0_i32 = arith.constant 0 : i32
    %c0_i32_0 = arith.constant 0 : i32
    return %arg0, %c0_i32 : i32, i32
  }
  func.func @transform_1(%arg0: i32) -> (i32, i32) {
    %c0_i32 = arith.constant 0 : i32
    %c0_i32_0 = arith.constant 0 : i32
    return %arg0, %c0_i32 : i32, i32
  }
  func.func @transform_2(%arg0: i32) -> (i32, i32) {
    %c0_i32 = arith.constant 0 : i32
    %c0_i32_0 = arith.constant 0 : i32
    %c0_i32_1 = arith.constant 0 : i32
    return %c0_i32, %c0_i32_0 : i32, i32
  }
  func.func @transform_3(%arg0: i32) -> (i32, i32) {
    %c0_i32 = arith.constant 0 : i32
    %c0_i32_0 = arith.constant 0 : i32
    %c0_i32_1 = arith.constant 0 : i32
    return %c0_i32, %c0_i32_0 : i32, i32
  }
  func.func @transform_4(%arg0: i32) -> (i32, i32) {
    %c0_i32 = arith.constant 0 : i32
    %c0_i32_0 = arith.constant 0 : i32
    %c0_i32_1 = arith.constant 0 : i32
    return %c0_i32, %c0_i32_0 : i32, i32
  }
  func.func @transform_5(%arg0: i32) -> (i32, i32) {
    %c0_i32 = arith.constant 0 : i32
    %c0_i32_0 = arith.constant 0 : i32
    %c0_i32_1 = arith.constant 0 : i32
    return %c0_i32, %c0_i32_0 : i32, i32
  }
  func.func @transform_6(%arg0: i32) -> (i32, i32) {
    %c0_i32 = arith.constant 0 : i32
    %c0_i32_0 = arith.constant 0 : i32
    %c0_i32_1 = arith.constant 0 : i32
    return %c0_i32, %c0_i32_0 : i32, i32
  }
  func.func @transform_7(%arg0: i32) -> (i32, i32) {
    %c0_i32 = arith.constant 0 : i32
    %c0_i32_0 = arith.constant 0 : i32
    %c0_i32_1 = arith.constant 0 : i32
    return %c0_i32, %c0_i32_0 : i32, i32
  }
  func.func @transform_8(%arg0: i32) -> (i32, i32) {
    %c0_i32 = arith.constant 0 : i32
    %c0_i32_0 = arith.constant 0 : i32
    %c0_i32_1 = arith.constant 0 : i32
    return %c0_i32, %c0_i32_0 : i32, i32
  }
  func.func @transform_9(%arg0: i32) -> (i32, i32) {
    %c0_i32 = arith.constant 0 : i32
    %c0_i32_0 = arith.constant 0 : i32
    %c0_i32_1 = arith.constant 0 : i32
    return %c0_i32, %c0_i32_0 : i32, i32
  }
  func.func @transform_10(%arg0: i32) -> (i32, i32) {
    %c0_i32 = arith.constant 0 : i32
    %c0_i32_0 = arith.constant 0 : i32
    %c0_i32_1 = arith.constant 0 : i32
    return %c0_i32, %c0_i32_0 : i32, i32
  }
  func.func @transform_11(%arg0: i32) -> (i32, i32) {
    %c0_i32 = arith.constant 0 : i32
    %c0_i32_0 = arith.constant 0 : i32
    return %arg0, %c0_i32 : i32, i32
  }
}

</mosaic_0001>

<llo_original>
// kernel: tpu_custom_call.1
$region0: #{tpu_custom_call.1}
  #allocation0 [shape = 'u32[]', space=smem, size = 0x4, offset = 0x4, fixed_abs, tag = 'smem constant byte address 0x4 - core index']
  #allocation1 [shape = 'u32[144,128]{1,0:T(1,128)}', space=vmem, size = 0x12000, scoped, tag = 'internal scratch']
  #allocation2 [shape = 'f32[1,1]{1,0:T(1,128)S(1)}', space=vmem, size = 0x200, scoped, tag = 'scoped memory for tpu_custom_call.1']
  %s0 = inlined_call_operand.vmem [shape: f32[2,1024], index: 0, kind: input, shape index: {}]
  %s1 = inlined_call_operand.vmem [shape: f32[2,6], index: 1, kind: input, shape index: {}]
  %s2 = inlined_call_operand.vmem [shape: f32[1024,32], index: 2, kind: input, shape index: {}]
  %s3 = inlined_call_operand.vmem [shape: f32[1,32], index: 3, kind: input, shape index: {}]
  %s4 = inlined_call_operand.vmem [shape: f32[6,32], index: 4, kind: input, shape index: {}]
  %s5 = inlined_call_operand.vmem [shape: f32[1,32], index: 5, kind: input, shape index: {}]
  %s6 = inlined_call_operand.vmem [shape: f32[32,32], index: 6, kind: input, shape index: {}]
  %s7 = inlined_call_operand.vmem [shape: f32[32,32], index: 7, kind: input, shape index: {}]
  %s8 = inlined_call_operand.vmem [shape: f32[1,32], index: 8, kind: input, shape index: {}]
  %s9 = inlined_call_operand.vmem [shape: f32[1,32], index: 9, kind: input, shape index: {}]
  %s10 = inlined_call_operand.<no memory space> [shape: f32[1,1], index: 10, kind: input, shape index: {}]
  %s11 = inlined_call_operand.vmem [shape: f32[2,1], index: 11, kind: output, shape index: {}]
  %s12 = sld [smem:[#allocation0]]
  $region54: #{tpu_custom_call.1} parent=0
    _
  %s14 = ssub.s32 1, %s12
  %s15 = scalar_select 0, %s14, %s12
  %v16 = vstv %s10
  %17 = vst [vmem:[#allocation2] sm:$0x1] %v16
  // Predicated region
  $region2: #{tpu_custom_call.1} parent=0 // pred_check
    _
  $region3: #{tpu_custom_call.1} parent=0 // pred_check_branch
    %19 = sbr.rel (0) target = $region5
  $region4: #{tpu_custom_call.1} parent=0 // pred_region
    _
  $region5: #{tpu_custom_call.1} parent=0 // pred_fallthru
    _
  // Predicated region
  $region6: #{tpu_custom_call.1} parent=0 // pred_check
    _
  $region7: #{tpu_custom_call.1} parent=0 // pred_check_branch
    %21 = sbr.rel (0) target = $region9
  $region8: #{tpu_custom_call.1} parent=0 // pred_region
    _
  $region9: #{tpu_custom_call.1} parent=0 // pred_fallthru
    _
  // Predicated region
  $region10: #{tpu_custom_call.1} parent=0 // pred_check
    _
  $region11: #{tpu_custom_call.1} parent=0 // pred_check_branch
    %23 = sbr.rel (0) target = $region13
  $region12: #{tpu_custom_call.1} parent=0 // pred_region
    _
  $region13: #{tpu_custom_call.1} parent=0 // pred_fallthru
    _
  // Predicated region
  $region14: #{tpu_custom_call.1} parent=0 // pred_check
    _
  $region15: #{tpu_custom_call.1} parent=0 // pred_check_branch
    %25 = sbr.rel (0) target = $region17
  $region16: #{tpu_custom_call.1} parent=0 // pred_region
    _
  $region17: #{tpu_custom_call.1} parent=0 // pred_fallthru
    _
  // Predicated region
  $region18: #{tpu_custom_call.1} parent=0 // pred_check
    _
  $region19: #{tpu_custom_call.1} parent=0 // pred_check_branch
    %27 = sbr.rel (0) target = $region21
  $region20: #{tpu_custom_call.1} parent=0 // pred_region
    _
  $region21: #{tpu_custom_call.1} parent=0 // pred_fallthru
    _
  // Predicated region
  $region22: #{tpu_custom_call.1} parent=0 // pred_check
    _
  $region23: #{tpu_custom_call.1} parent=0 // pred_check_branch
    %29 = sbr.rel (0) target = $region25
  $region24: #{tpu_custom_call.1} parent=0 // pred_region
    _
  $region25: #{tpu_custom_call.1} parent=0 // pred_fallthru
    _
  // Predicated region
  $region26: #{tpu_custom_call.1} parent=0 // pred_check
    _
  $region27: #{tpu_custom_call.1} parent=0 // pred_check_branch
    %31 = sbr.rel (0) target = $region29
  $region28: #{tpu_custom_call.1} parent=0 // pred_region
    _
  $region29: #{tpu_custom_call.1} parent=0 // pred_fallthru
    _
  // Predicated region
  $region30: #{tpu_custom_call.1} parent=0 // pred_check
    _
  $region31: #{tpu_custom_call.1} parent=0 // pred_check_branch
    %33 = sbr.rel (0) target = $region33
  $region32: #{tpu_custom_call.1} parent=0 // pred_region
    _
  $region33: #{tpu_custom_call.1} parent=0 // pred_fallthru
    _
  // Predicated region
  $region34: #{tpu_custom_call.1} parent=0 // pred_check
    _
  $region35: #{tpu_custom_call.1} parent=0 // pred_check_branch
    %35 = sbr.rel (0) target = $region37
  $region36: #{tpu_custom_call.1} parent=0 // pred_region
    _
  $region37: #{tpu_custom_call.1} parent=0 // pred_fallthru
    _
  // Predicated region
  $region38: #{tpu_custom_call.1} parent=0 // pred_check
    _
  $region39: #{tpu_custom_call.1} parent=0 // pred_check_branch
    %37 = sbr.rel (0) target = $region41
  $region40: #{tpu_custom_call.1} parent=0 // pred_region
    _
  $region41: #{tpu_custom_call.1} parent=0 // pred_fallthru
    _
  // Predicated region
  $region42: #{tpu_custom_call.1} parent=0 // pred_check
    _
  $region43: #{tpu_custom_call.1} parent=0 // pred_check_branch
    %39 = sbr.rel (0) target = $region45
  $region44: #{tpu_custom_call.1} parent=0 // pred_region
    _
  $region45: #{tpu_custom_call.1} parent=0 // pred_fallthru
    _
  %v40 = vld [vmem:[%s0] sm:$0xff]
  %v41 = vld [vmem:[%s0 + $0x8] sm:$0xff]
  %v42 = vld [vmem:[%s2] sm:$0xff]
  %v43 = vld [vmem:[%s2 + $0x8] sm:$0xff]
  %v44 = vld [vmem:[%s2 + $0x10] sm:$0xff]
  %v45 = vld [vmem:[%s2 + $0x18] sm:$0xff]
  %v46 = vld [vmem:[%s2 + $0x20] sm:$0xff]
  %v47 = vld [vmem:[%s2 + $0x28] sm:$0xff]
  %v48 = vld [vmem:[%s2 + $0x30] sm:$0xff]
  %v49 = vld [vmem:[%s2 + $0x38] sm:$0xff]
  %v50 = vld [vmem:[%s2 + $0x40] sm:$0xff]
  %v51 = vld [vmem:[%s2 + $0x48] sm:$0xff]
  %v52 = vld [vmem:[%s2 + $0x50] sm:$0xff]
  %v53 = vld [vmem:[%s2 + $0x58] sm:$0xff]
  %v54 = vld [vmem:[%s2 + $0x60] sm:$0xff]
  %v55 = vld [vmem:[%s2 + $0x68] sm:$0xff]
  %v56 = vld [vmem:[%s2 + $0x70] sm:$0xff]
  %v57 = vld [vmem:[%s2 + $0x78] sm:$0xff]
  %v58 = vld [vmem:[%s2 + $0x80] sm:$0xff]
  %v59 = vld [vmem:[%s2 + $0x88] sm:$0xff]
  %v60 = vld [vmem:[%s2 + $0x90] sm:$0xff]
  %v61 = vld [vmem:[%s2 + $0x98] sm:$0xff]
  %v62 = vld [vmem:[%s2 + $0xa0] sm:$0xff]
  %v63 = vld [vmem:[%s2 + $0xa8] sm:$0xff]
  %v64 = vld [vmem:[%s2 + $0xb0] sm:$0xff]
  %v65 = vld [vmem:[%s2 + $0xb8] sm:$0xff]
  %v66 = vld [vmem:[%s2 + $0xc0] sm:$0xff]
  %v67 = vld [vmem:[%s2 + $0xc8] sm:$0xff]
  %v68 = vld [vmem:[%s2 + $0xd0] sm:$0xff]
  %v69 = vld [vmem:[%s2 + $0xd8] sm:$0xff]
  %v70 = vld [vmem:[%s2 + $0xe0] sm:$0xff]
  %v71 = vld [vmem:[%s2 + $0xe8] sm:$0xff]
  %v72 = vld [vmem:[%s2 + $0xf0] sm:$0xff]
  %v73 = vld [vmem:[%s2 + $0xf8] sm:$0xff]
  %v74 = vld [vmem:[%s2 + $0x100] sm:$0xff]
  %v75 = vld [vmem:[%s2 + $0x108] sm:$0xff]
  %v76 = vld [vmem:[%s2 + $0x110] sm:$0xff]
  %v77 = vld [vmem:[%s2 + $0x118] sm:$0xff]
  %v78 = vld [vmem:[%s2 + $0x120] sm:$0xff]
  %v79 = vld [vmem:[%s2 + $0x128] sm:$0xff]
  %v80 = vld [vmem:[%s2 + $0x130] sm:$0xff]
  %v81 = vld [vmem:[%s2 + $0x138] sm:$0xff]
  %v82 = vld [vmem:[%s2 + $0x140] sm:$0xff]
  %v83 = vld [vmem:[%s2 + $0x148] sm:$0xff]
  %v84 = vld [vmem:[%s2 + $0x150] sm:$0xff]
  %v85 = vld [vmem:[%s2 + $0x158] sm:$0xff]
  %v86 = vld [vmem:[%s2 + $0x160] sm:$0xff]
  %v87 = vld [vmem:[%s2 + $0x168] sm:$0xff]
  %v88 = vld [vmem:[%s2 + $0x170] sm:$0xff]
  %v89 = vld [vmem:[%s2 + $0x178] sm:$0xff]
  %v90 = vld [vmem:[%s2 + $0x180] sm:$0xff]
  %v91 = vld [vmem:[%s2 + $0x188] sm:$0xff]
  %v92 = vld [vmem:[%s2 + $0x190] sm:$0xff]
  %v93 = vld [vmem:[%s2 + $0x198] sm:$0xff]
  %v94 = vld [vmem:[%s2 + $0x1a0] sm:$0xff]
  %v95 = vld [vmem:[%s2 + $0x1a8] sm:$0xff]
  %v96 = vld [vmem:[%s2 + $0x1b0] sm:$0xff]
  %v97 = vld [vmem:[%s2 + $0x1b8] sm:$0xff]
  %v98 = vld [vmem:[%s2 + $0x1c0] sm:$0xff]
  %v99 = vld [vmem:[%s2 + $0x1c8] sm:$0xff]
  %v100 = vld [vmem:[%s2 + $0x1d0] sm:$0xff]
  %v101 = vld [vmem:[%s2 + $0x1d8] sm:$0xff]
  %v102 = vld [vmem:[%s2 + $0x1e0] sm:$0xff]
  %v103 = vld [vmem:[%s2 + $0x1e8] sm:$0xff]
  %v104 = vld [vmem:[%s2 + $0x1f0] sm:$0xff]
  %v105 = vld [vmem:[%s2 + $0x1f8] sm:$0xff]
  %v106 = vld [vmem:[%s2 + $0x200] sm:$0xff]
  %v107 = vld [vmem:[%s2 + $0x208] sm:$0xff]
  %v108 = vld [vmem:[%s2 + $0x210] sm:$0xff]
  %v109 = vld [vmem:[%s2 + $0x218] sm:$0xff]
  %v110 = vld [vmem:[%s2 + $0x220] sm:$0xff]
  %v111 = vld [vmem:[%s2 + $0x228] sm:$0xff]
  %v112 = vld [vmem:[%s2 + $0x230] sm:$0xff]
  %v113 = vld [vmem:[%s2 + $0x238] sm:$0xff]
  %v114 = vld [vmem:[%s2 + $0x240] sm:$0xff]
  %v115 = vld [vmem:[%s2 + $0x248] sm:$0xff]
  %v116 = vld [vmem:[%s2 + $0x250] sm:$0xff]
  %v117 = vld [vmem:[%s2 + $0x258] sm:$0xff]
  %v118 = vld [vmem:[%s2 + $0x260] sm:$0xff]
  %v119 = vld [vmem:[%s2 + $0x268] sm:$0xff]
  %v120 = vld [vmem:[%s2 + $0x270] sm:$0xff]
  %v121 = vld [vmem:[%s2 + $0x278] sm:$0xff]
  %v122 = vld [vmem:[%s2 + $0x280] sm:$0xff]
  %v123 = vld [vmem:[%s2 + $0x288] sm:$0xff]
  %v124 = vld [vmem:[%s2 + $0x290] sm:$0xff]
  %v125 = vld [vmem:[%s2 + $0x298] sm:$0xff]
  %v126 = vld [vmem:[%s2 + $0x2a0] sm:$0xff]
  %v127 = vld [vmem:[%s2 + $0x2a8] sm:$0xff]
  %v128 = vld [vmem:[%s2 + $0x2b0] sm:$0xff]
  %v129 = vld [vmem:[%s2 + $0x2b8] sm:$0xff]
  %v130 = vld [vmem:[%s2 + $0x2c0] sm:$0xff]
  %v131 = vld [vmem:[%s2 + $0x2c8] sm:$0xff]
  %v132 = vld [vmem:[%s2 + $0x2d0] sm:$0xff]
  %v133 = vld [vmem:[%s2 + $0x2d8] sm:$0xff]
  %v134 = vld [vmem:[%s2 + $0x2e0] sm:$0xff]
  %v135 = vld [vmem:[%s2 + $0x2e8] sm:$0xff]
  %v136 = vld [vmem:[%s2 + $0x2f0] sm:$0xff]
  %v137 = vld [vmem:[%s2 + $0x2f8] sm:$0xff]
  %v138 = vld [vmem:[%s2 + $0x300] sm:$0xff]
  %v139 = vld [vmem:[%s2 + $0x308] sm:$0xff]
  %v140 = vld [vmem:[%s2 + $0x310] sm:$0xff]
  %v141 = vld [vmem:[%s2 + $0x318] sm:$0xff]
  %v142 = vld [vmem:[%s2 + $0x320] sm:$0xff]
  %v143 = vld [vmem:[%s2 + $0x328] sm:$0xff]
  %v144 = vld [vmem:[%s2 + $0x330] sm:$0xff]
  %v145 = vld [vmem:[%s2 + $0x338] sm:$0xff]
  %v146 = vld [vmem:[%s2 + $0x340] sm:$0xff]
  %v147 = vld [vmem:[%s2 + $0x348] sm:$0xff]
  %v148 = vld [vmem:[%s2 + $0x350] sm:$0xff]
  %v149 = vld [vmem:[%s2 + $0x358] sm:$0xff]
  %v150 = vld [vmem:[%s2 + $0x360] sm:$0xff]
  %v151 = vld [vmem:[%s2 + $0x368] sm:$0xff]
  %v152 = vld [vmem:[%s2 + $0x370] sm:$0xff]
  %v153 = vld [vmem:[%s2 + $0x378] sm:$0xff]
  %v154 = vld [vmem:[%s2 + $0x380] sm:$0xff]
  %v155 = vld [vmem:[%s2 + $0x388] sm:$0xff]
  %v156 = vld [vmem:[%s2 + $0x390] sm:$0xff]
  %v157 = vld [vmem:[%s2 + $0x398] sm:$0xff]
  %v158 = vld [vmem:[%s2 + $0x3a0] sm:$0xff]
  %v159 = vld [vmem:[%s2 + $0x3a8] sm:$0xff]
  %v160 = vld [vmem:[%s2 + $0x3b0] sm:$0xff]
  %v161 = vld [vmem:[%s2 + $0x3b8] sm:$0xff]
  %v162 = vld [vmem:[%s2 + $0x3c0] sm:$0xff]
  %v163 = vld [vmem:[%s2 + $0x3c8] sm:$0xff]
  %v164 = vld [vmem:[%s2 + $0x3d0] sm:$0xff]
  %v165 = vld [vmem:[%s2 + $0x3d8] sm:$0xff]
  %v166 = vld [vmem:[%s2 + $0x3e0] sm:$0xff]
  %v167 = vld [vmem:[%s2 + $0x3e8] sm:$0xff]
  %v168 = vld [vmem:[%s2 + $0x3f0] sm:$0xff]
  %v169 = vld [vmem:[%s2 + $0x3f8] sm:$0xff]
  %v170 = vld [vmem:[%s3] sm:$0x1]
  %v172 = vlaneseq
  %v173 = vshrl.u32 %v172, 7
  %v174 = vsub.s32 0, %v173
  %v175 = vrot.slane %v170, %v174
  %v179 = vcombine.high %v40, %v40
  %v181 = vunpack.c.l.s4 1983009808
  %v182 = vunpack.c.0.s8 %v181
  %v183 = vlaneseq
  %v184 = vshrl.u32 %v183, 7
  %v185 = vsub.s32 %v182, %v184
  %v186 = vrot.slane %v40, %v185
  %v188 = vunpack.c.l.s4 1983009808
  %v189 = vunpack.c.0.s8 %v188
  %v190 = vlaneseq
  %v191 = vshrl.u32 %v190, 7
  %v192 = vsub.s32 %v189, %v191
  %v193 = vrot.slane %v179, %v192
  %v194 = vcombine.high %v186, %v186
  %v195 = vcombine.high %v193, %v193
  %v196 = vcombine.high %v41, %v41
  %v198 = vunpack.c.l.s4 1983009808
  %v199 = vunpack.c.0.s8 %v198
  %v200 = vlaneseq
  %v201 = vshrl.u32 %v200, 7
  %v202 = vsub.s32 %v199, %v201
  %v203 = vrot.slane %v41, %v202
  %v205 = vunpack.c.l.s4 1983009808
  %v206 = vunpack.c.0.s8 %v205
  %v207 = vlaneseq
  %v208 = vshrl.u32 %v207, 7
  %v209 = vsub.s32 %v206, %v208
  %v210 = vrot.slane %v196, %v209
  %v211 = vcombine.high %v203, %v203
  %v212 = vcombine.high %v210, %v210
  %221 = vmatprep.subr.mxu0 0.0
  %222 = vmatpush1.msra.mxu0 %v42
  %223 = vmatprep.subr.mxu0 0.0
  %224 = vmatpush1.msra.mxu0 %v43
  %225 = vmatprep.subr.mxu0 0.0
  %226 = vmatpush1.msra.mxu0 %v44
  %227 = vmatprep.subr.mxu0 0.0
  %228 = vmatpush1.msra.mxu0 %v45
  %229 = vmatprep.subr.mxu0 0.0
  %230 = vmatpush1.msra.mxu0 %v46
  %231 = vmatprep.subr.mxu0 0.0
  %232 = vmatpush1.msra.mxu0 %v47
  %233 = vmatprep.subr.mxu0 0.0
  %234 = vmatpush1.msra.mxu0 %v48
  %235 = vmatprep.subr.mxu0 0.0
  %236 = vmatpush1.msra.mxu0 %v49
  %237 = vmatprep.subr.mxu0 0.0
  %238 = vmatpush1.msra.mxu0 %v50
  %239 = vmatprep.subr.mxu0 0.0
  %240 = vmatpush1.msra.mxu0 %v51
  %241 = vmatprep.subr.mxu0 0.0
  %242 = vmatpush1.msra.mxu0 %v52
  %243 = vmatprep.subr.mxu0 0.0
  %244 = vmatpush1.msra.mxu0 %v53
  %245 = vmatprep.subr.mxu0 0.0
  %246 = vmatpush1.msra.mxu0 %v54
  %247 = vmatprep.subr.mxu0 0.0
  %248 = vmatpush1.msra.mxu0 %v55
  %249 = vmatprep.subr.mxu0 0.0
  %250 = vmatpush1.msra.mxu0 %v56
  %251 = vmatprep.subr.mxu0 0.0
  %252 = vmatpush1.msra.mxu0 %v57
  %253 = vmatprep.subr.mxu0 0.0
  %254 = vmatpush1.msra.mxu0 %v58
  %255 = vmatprep.subr.mxu0 0.0
  %256 = vmatpush1.msra.mxu0 %v59
  %257 = vmatprep.subr.mxu0 0.0
  %258 = vmatpush1.msra.mxu0 %v60
  %259 = vmatprep.subr.mxu0 0.0
  %260 = vmatpush1.msra.mxu0 %v61
  %261 = vmatprep.subr.mxu0 0.0
  %262 = vmatpush1.msra.mxu0 %v62
  %263 = vmatprep.subr.mxu0 0.0
  %264 = vmatpush1.msra.mxu0 %v63
  %265 = vmatprep.subr.mxu0 0.0
  %266 = vmatpush1.msra.mxu0 %v64
  %267 = vmatprep.subr.mxu0 0.0
  %268 = vmatpush1.msra.mxu0 %v65
  %269 = vmatprep.subr.mxu0 0.0
  %270 = vmatpush1.msra.mxu0 %v66
  %271 = vmatprep.subr.mxu0 0.0
  %272 = vmatpush1.msra.mxu0 %v67
  %273 = vmatprep.subr.mxu0 0.0
  %274 = vmatpush1.msra.mxu0 %v68
  %275 = vmatprep.subr.mxu0 0.0
  %276 = vmatpush1.msra.mxu0 %v69
  %277 = vmatprep.subr.mxu0 0.0
  %278 = vmatpush1.msra.mxu0 %v70
  %279 = vmatprep.subr.mxu0 0.0
  %280 = vmatpush1.msra.mxu0 %v71
  %281 = vmatprep.subr.mxu0 0.0
  %282 = vmatpush1.msra.mxu0 %v72
  %283 = vmatprep.subr.mxu0 0.0
  %284 = vmatpush1.msra.mxu0 %v73
  %285 = vmatprep.mubr.f32.mxu0 %v194
  %286 = vmatmul.mubr.f32.gmra.mrb[0].mxu0 %v186
  %v287 = vpop.f32.mrb[0].mxu0
  %v288 = vadd.f32 %v175, %v287
  %v289 = vpop.f32.mrb[0].mxu0
  %290 = vdwg.mxu0
  %291 = vmatprep.subr.mxu0 0.0
  %292 = vmatpush1.msra.mxu0 %v74
  %293 = vmatprep.subr.mxu0 0.0
  %294 = vmatpush1.msra.mxu0 %v75
  %295 = vmatprep.subr.mxu0 0.0
  %296 = vmatpush1.msra.mxu0 %v76
  %297 = vmatprep.subr.mxu0 0.0
  %298 = vmatpush1.msra.mxu0 %v77
  %299 = vmatprep.subr.mxu0 0.0
  %300 = vmatpush1.msra.mxu0 %v78
  %301 = vmatprep.subr.mxu0 0.0
  %302 = vmatpush1.msra.mxu0 %v79
  %303 = vmatprep.subr.mxu0 0.0
  %304 = vmatpush1.msra.mxu0 %v80
  %305 = vmatprep.subr.mxu0 0.0
  %306 = vmatpush1.msra.mxu0 %v81
  %307 = vmatprep.subr.mxu0 0.0
  %308 = vmatpush1.msra.mxu0 %v82
  %309 = vmatprep.subr.mxu0 0.0
  %310 = vmatpush1.msra.mxu0 %v83
  %311 = vmatprep.subr.mxu0 0.0
  %312 = vmatpush1.msra.mxu0 %v84
  %313 = vmatprep.subr.mxu0 0.0
  %314 = vmatpush1.msra.mxu0 %v85
  %315 = vmatprep.subr.mxu0 0.0
  %316 = vmatpush1.msra.mxu0 %v86
  %317 = vmatprep.subr.mxu0 0.0
  %318 = vmatpush1.msra.mxu0 %v87
  %319 = vmatprep.subr.mxu0 0.0
  %320 = vmatpush1.msra.mxu0 %v88
  %321 = vmatprep.subr.mxu0 0.0
  %322 = vmatpush1.msra.mxu0 %v89
  %323 = vmatprep.subr.mxu0 0.0
  %324 = vmatpush1.msra.mxu0 %v90
  %325 = vmatprep.subr.mxu0 0.0
  %326 = vmatpush1.msra.mxu0 %v91
  %327 = vmatprep.subr.mxu0 0.0
  %328 = vmatpush1.msra.mxu0 %v92
  %329 = vmatprep.subr.mxu0 0.0
  %330 = vmatpush1.msra.mxu0 %v93
  %331 = vmatprep.subr.mxu0 0.0
  %332 = vmatpush1.msra.mxu0 %v94
  %333 = vmatprep.subr.mxu0 0.0
  %334 = vmatpush1.msra.mxu0 %v95
  %335 = vmatprep.subr.mxu0 0.0
  %336 = vmatpush1.msra.mxu0 %v96
  %337 = vmatprep.subr.mxu0 0.0
  %338 = vmatpush1.msra.mxu0 %v97
  %339 = vmatprep.subr.mxu0 0.0
  %340 = vmatpush1.msra.mxu0 %v98
  %341 = vmatprep.subr.mxu0 0.0
  %342 = vmatpush1.msra.mxu0 %v99
  %343 = vmatprep.subr.mxu0 0.0
  %344 = vmatpush1.msra.mxu0 %v100
  %345 = vmatprep.subr.mxu0 0.0
  %346 = vmatpush1.msra.mxu0 %v101
  %347 = vmatprep.subr.mxu0 0.0
  %348 = vmatpush1.msra.mxu0 %v102
  %349 = vmatprep.subr.mxu0 0.0
  %350 = vmatpush1.msra.mxu0 %v103
  %351 = vmatprep.subr.mxu0 0.0
  %352 = vmatpush1.msra.mxu0 %v104
  %353 = vmatprep.subr.mxu0 0.0
  %354 = vmatpush1.msra.mxu0 %v105
  %355 = vmatprep.mubr.f32.mxu0 %v195
  %356 = vmatmul.mubr.f32.gmra.mrb[0].mxu0 %v193
  %v357 = vpop.f32.mrb[0].mxu0
  %v358 = vadd.f32 %v288, %v357
  %v359 = vpop.f32.mrb[0].mxu0
  %360 = vdwg.mxu0
  %361 = vmatprep.subr.mxu0 0.0
  %362 = vmatpush1.msra.mxu0 %v106
  %363 = vmatprep.subr.mxu0 0.0
  %364 = vmatpush1.msra.mxu0 %v107
  %365 = vmatprep.subr.mxu0 0.0
  %366 = vmatpush1.msra.mxu0 %v108
  %367 = vmatprep.subr.mxu0 0.0
  %368 = vmatpush1.msra.mxu0 %v109
  %369 = vmatprep.subr.mxu0 0.0
  %370 = vmatpush1.msra.mxu0 %v110
  %371 = vmatprep.subr.mxu0 0.0
  %372 = vmatpush1.msra.mxu0 %v111
  %373 = vmatprep.subr.mxu0 0.0
  %374 = vmatpush1.msra.mxu0 %v112
  %375 = vmatprep.subr.mxu0 0.0
  %376 = vmatpush1.msra.mxu0 %v113
  %377 = vmatprep.subr.mxu0 0.0
  %378 = vmatpush1.msra.mxu0 %v114
  %379 = vmatprep.subr.mxu0 0.0
  %380 = vmatpush1.msra.mxu0 %v115
  %381 = vmatprep.subr.mxu0 0.0
  %382 = vmatpush1.msra.mxu0 %v116
  %383 = vmatprep.subr.mxu0 0.0
  %384 = vmatpush1.msra.mxu0 %v117
  %385 = vmatprep.subr.mxu0 0.0
  %386 = vmatpush1.msra.mxu0 %v118
  %387 = vmatprep.subr.mxu0 0.0
  %388 = vmatpush1.msra.mxu0 %v119
  %389 = vmatprep.subr.mxu0 0.0
  %390 = vmatpush1.msra.mxu0 %v120
  %391 = vmatprep.subr.mxu0 0.0
  %392 = vmatpush1.msra.mxu0 %v121
  %393 = vmatprep.subr.mxu0 0.0
  %394 = vmatpush1.msra.mxu0 %v122
  %395 = vmatprep.subr.mxu0 0.0
  %396 = vmatpush1.msra.mxu0 %v123
  %397 = vmatprep.subr.mxu0 0.0
  %398 = vmatpush1.msra.mxu0 %v124
  %399 = vmatprep.subr.mxu0 0.0
  %400 = vmatpush1.msra.mxu0 %v125
  %401 = vmatprep.subr.mxu0 0.0
  %402 = vmatpush1.msra.mxu0 %v126
  %403 = vmatprep.subr.mxu0 0.0
  %404 = vmatpush1.msra.mxu0 %v127
  %405 = vmatprep.subr.mxu0 0.0
  %406 = vmatpush1.msra.mxu0 %v128
  %407 = vmatprep.subr.mxu0 0.0
  %408 = vmatpush1.msra.mxu0 %v129
  %409 = vmatprep.subr.mxu0 0.0
  %410 = vmatpush1.msra.mxu0 %v130
  %411 = vmatprep.subr.mxu0 0.0
  %412 = vmatpush1.msra.mxu0 %v131
  %413 = vmatprep.subr.mxu0 0.0
  %414 = vmatpush1.msra.mxu0 %v132
  %415 = vmatprep.subr.mxu0 0.0
  %416 = vmatpush1.msra.mxu0 %v133
  %417 = vmatprep.subr.mxu0 0.0
  %418 = vmatpush1.msra.mxu0 %v134
  %419 = vmatprep.subr.mxu0 0.0
  %420 = vmatpush1.msra.mxu0 %v135
  %421 = vmatprep.subr.mxu0 0.0
  %422 = vmatpush1.msra.mxu0 %v136
  %423 = vmatprep.subr.mxu0 0.0
  %424 = vmatpush1.msra.mxu0 %v137
  %425 = vmatprep.mubr.f32.mxu0 %v211
  %426 = vmatmul.mubr.f32.gmra.mrb[0].mxu0 %v203
  %v427 = vpop.f32.mrb[0].mxu0
  %v428 = vadd.f32 %v358, %v427
  %v429 = vpop.f32.mrb[0].mxu0
  %430 = vdwg.mxu0
  %431 = vmatprep.subr.mxu0 0.0
  %432 = vmatpush1.msra.mxu0 %v138
  %433 = vmatprep.subr.mxu0 0.0
  %434 = vmatpush1.msra.mxu0 %v139
  %435 = vmatprep.subr.mxu0 0.0
  %436 = vmatpush1.msra.mxu0 %v140
  %437 = vmatprep.subr.mxu0 0.0
  %438 = vmatpush1.msra.mxu0 %v141
  %439 = vmatprep.subr.mxu0 0.0
  %440 = vmatpush1.msra.mxu0 %v142
  %441 = vmatprep.subr.mxu0 0.0
  %442 = vmatpush1.msra.mxu0 %v143
  %443 = vmatprep.subr.mxu0 0.0
  %444 = vmatpush1.msra.mxu0 %v144
  %445 = vmatprep.subr.mxu0 0.0
  %446 = vmatpush1.msra.mxu0 %v145
  %447 = vmatprep.subr.mxu0 0.0
  %448 = vmatpush1.msra.mxu0 %v146
  %449 = vmatprep.subr.mxu0 0.0
  %450 = vmatpush1.msra.mxu0 %v147
  %451 = vmatprep.subr.mxu0 0.0
  %452 = vmatpush1.msra.mxu0 %v148
  %453 = vmatprep.subr.mxu0 0.0
  %454 = vmatpush1.msra.mxu0 %v149
  %455 = vmatprep.subr.mxu0 0.0
  %456 = vmatpush1.msra.mxu0 %v150
  %457 = vmatprep.subr.mxu0 0.0
  %458 = vmatpush1.msra.mxu0 %v151
  %459 = vmatprep.subr.mxu0 0.0
  %460 = vmatpush1.msra.mxu0 %v152
  %461 = vmatprep.subr.mxu0 0.0
  %462 = vmatpush1.msra.mxu0 %v153
  %463 = vmatprep.subr.mxu0 0.0
  %464 = vmatpush1.msra.mxu0 %v154
  %465 = vmatprep.subr.mxu0 0.0
  %466 = vmatpush1.msra.mxu0 %v155
  %467 = vmatprep.subr.mxu0 0.0
  %468 = vmatpush1.msra.mxu0 %v156
  %469 = vmatprep.subr.mxu0 0.0
  %470 = vmatpush1.msra.mxu0 %v157
  %471 = vmatprep.subr.mxu0 0.0
  %472 = vmatpush1.msra.mxu0 %v158
  %473 = vmatprep.subr.mxu0 0.0
  %474 = vmatpush1.msra.mxu0 %v159
  %475 = vmatprep.subr.mxu0 0.0
  %476 = vmatpush1.msra.mxu0 %v160
  %477 = vmatprep.subr.mxu0 0.0
  %478 = vmatpush1.msra.mxu0 %v161
  %479 = vmatprep.subr.mxu0 0.0
  %480 = vmatpush1.msra.mxu0 %v162
  %481 = vmatprep.subr.mxu0 0.0
  %482 = vmatpush1.msra.mxu0 %v163
  %483 = vmatprep.subr.mxu0 0.0
  %484 = vmatpush1.msra.mxu0 %v164
  %485 = vmatprep.subr.mxu0 0.0
  %486 = vmatpush1.msra.mxu0 %v165
  %487 = vmatprep.subr.mxu0 0.0
  %488 = vmatpush1.msra.mxu0 %v166
  %489 = vmatprep.subr.mxu0 0.0
  %490 = vmatpush1.msra.mxu0 %v167
  %491 = vmatprep.subr.mxu0 0.0
  %492 = vmatpush1.msra.mxu0 %v168
  %493 = vmatprep.subr.mxu0 0.0
  %494 = vmatpush1.msra.mxu0 %v169
  %495 = vmatprep.mubr.f32.mxu0 %v212
  %496 = vmatmul.mubr.f32.gmra.mrb[0].mxu0 %v210
  %v497 = vpop.f32.mrb[0].mxu0
  %v498 = vadd.f32 %v428, %v497
  %v499 = vpop.f32.mrb[0].mxu0
  %500 = vdwg.mxu0
  %v501 = vmax.f32 %v498, 0.0
  %v502 = vld [vmem:[%s1] sm:$0x3]
  %v503 = vld [vmem:[%s4] sm:$0x3f]
  %v504 = vld [vmem:[%s5] sm:$0x1]
  %v506 = vlaneseq
  %v507 = vshrl.u32 %v506, 7
  %v508 = vsub.s32 0, %v507
  %v509 = vrot.slane %v504, %v508
  %vm511 = vcmask 48128
  %v513 = vsel %vm511, %v502, 0
  %vm515 = vcmask 1045504
  %v517 = vsel %vm515, %v503, 0
  %519 = vmatprep.subr.mxu0 0.0
  %520 = vmatpush1.msra.mxu0 %v517
  %521 = vmatprep.subr.mxu0 0.0
  %522 = vmatpush1.msra.mxu0 0.0
  %523 = vmatprep.subr.mxu0 0.0
  %524 = vmatpush1.msra.mxu0 0.0
  %525 = vmatprep.subr.mxu0 0.0
  %526 = vmatpush1.msra.mxu0 0.0
  %527 = vmatprep.subr.mxu0 0.0
  %528 = vmatpush1.msra.mxu0 0.0
  %529 = vmatprep.subr.mxu0 0.0
  %530 = vmatpush1.msra.mxu0 0.0
  %531 = vmatprep.subr.mxu0 0.0
  %532 = vmatpush1.msra.mxu0 0.0
  %533 = vmatprep.subr.mxu0 0.0
  %534 = vmatpush1.msra.mxu0 0.0
  %535 = vmatprep.subr.mxu0 0.0
  %536 = vmatpush1.msra.mxu0 0.0
  %537 = vmatprep.subr.mxu0 0.0
  %538 = vmatpush1.msra.mxu0 0.0
  %539 = vmatprep.subr.mxu0 0.0
  %540 = vmatpush1.msra.mxu0 0.0
  %541 = vmatprep.subr.mxu0 0.0
  %542 = vmatpush1.msra.mxu0 0.0
  %543 = vmatprep.subr.mxu0 0.0
  %544 = vmatpush1.msra.mxu0 0.0
  %545 = vmatprep.subr.mxu0 0.0
  %546 = vmatpush1.msra.mxu0 0.0
  %547 = vmatprep.subr.mxu0 0.0
  %548 = vmatpush1.msra.mxu0 0.0
  %549 = vmatprep.subr.mxu0 0.0
  %550 = vmatpush1.msra.mxu0 0.0
  %551 = vmatprep.subr.mxu0 0.0
  %552 = vmatpush1.msra.mxu0 0.0
  %553 = vmatprep.subr.mxu0 0.0
  %554 = vmatpush1.msra.mxu0 0.0
  %555 = vmatprep.subr.mxu0 0.0
  %556 = vmatpush1.msra.mxu0 0.0
  %557 = vmatprep.subr.mxu0 0.0
  %558 = vmatpush1.msra.mxu0 0.0
  %559 = vmatprep.subr.mxu0 0.0
  %560 = vmatpush1.msra.mxu0 0.0
  %561 = vmatprep.subr.mxu0 0.0
  %562 = vmatpush1.msra.mxu0 0.0
  %563 = vmatprep.subr.mxu0 0.0
  %564 = vmatpush1.msra.mxu0 0.0
  %565 = vmatprep.subr.mxu0 0.0
  %566 = vmatpush1.msra.mxu0 0.0
  %567 = vmatprep.subr.mxu0 0.0
  %568 = vmatpush1.msra.mxu0 0.0
  %569 = vmatprep.subr.mxu0 0.0
  %570 = vmatpush1.msra.mxu0 0.0
  %571 = vmatprep.subr.mxu0 0.0
  %572 = vmatpush1.msra.mxu0 0.0
  %573 = vmatprep.subr.mxu0 0.0
  %574 = vmatpush1.msra.mxu0 0.0
  %575 = vmatprep.subr.mxu0 0.0
  %576 = vmatpush1.msra.mxu0 0.0
  %577 = vmatprep.subr.mxu0 0.0
  %578 = vmatpush1.msra.mxu0 0.0
  %579 = vmatprep.subr.mxu0 0.0
  %580 = vmatpush1.msra.mxu0 0.0
  %581 = vmatprep.subr.mxu0 0.0
  %582 = vmatpush1.msra.mxu0 0.0
  %583 = vmatprep.mubr.f32.mxu0 0.0
  %584 = vmatmul.mubr.f32.gmra.mrb[0].mxu0 %v513
  %v585 = vpop.f32.mrb[0].mxu0
  %v586 = vadd.f32 %v509, %v585
  %v587 = vpop.f32.mrb[0].mxu0
  %588 = vdwg.mxu0
  %v589 = vmax.f32 %v586, 0.0
  %v590 = vld [vmem:[%s6] sm:$0xff]
  %v591 = vld [vmem:[%s6 + $0x8] sm:$0xff]
  %v592 = vld [vmem:[%s6 + $0x10] sm:$0xff]
  %v593 = vld [vmem:[%s6 + $0x18] sm:$0xff]
  %v594 = vld [vmem:[%s7] sm:$0xff]
  %v595 = vld [vmem:[%s7 + $0x8] sm:$0xff]
  %v596 = vld [vmem:[%s7 + $0x10] sm:$0xff]
  %v597 = vld [vmem:[%s7 + $0x18] sm:$0xff]
  %vm598 = vcmask 261120
  %v600 = vsel %vm598, %v589, 0
  %602 = vmatprep.subr.mxu0 0.0
  %603 = vmatpush1.msra.mxu0 %v594
  %604 = vmatprep.subr.mxu0 0.0
  %605 = vmatpush1.msra.mxu0 %v595
  %606 = vmatprep.subr.mxu0 0.0
  %607 = vmatpush1.msra.mxu0 %v596
  %608 = vmatprep.subr.mxu0 0.0
  %609 = vmatpush1.msra.mxu0 %v597
  %610 = vmatprep.subr.mxu0 0.0
  %611 = vmatpush1.msra.mxu0 0.0
  %612 = vmatprep.subr.mxu0 0.0
  %613 = vmatpush1.msra.mxu0 0.0
  %614 = vmatprep.subr.mxu0 0.0
  %615 = vmatpush1.msra.mxu0 0.0
  %616 = vmatprep.subr.mxu0 0.0
  %617 = vmatpush1.msra.mxu0 0.0
  %618 = vmatprep.subr.mxu0 0.0
  %619 = vmatpush1.msra.mxu0 0.0
  %620 = vmatprep.subr.mxu0 0.0
  %621 = vmatpush1.msra.mxu0 0.0
  %622 = vmatprep.subr.mxu0 0.0
  %623 = vmatpush1.msra.mxu0 0.0
  %624 = vmatprep.subr.mxu0 0.0
  %625 = vmatpush1.msra.mxu0 0.0
  %626 = vmatprep.subr.mxu0 0.0
  %627 = vmatpush1.msra.mxu0 0.0
  %628 = vmatprep.subr.mxu0 0.0
  %629 = vmatpush1.msra.mxu0 0.0
  %630 = vmatprep.subr.mxu0 0.0
  %631 = vmatpush1.msra.mxu0 0.0
  %632 = vmatprep.subr.mxu0 0.0
  %633 = vmatpush1.msra.mxu0 0.0
  %634 = vmatprep.subr.mxu0 0.0
  %635 = vmatpush1.msra.mxu0 0.0
  %636 = vmatprep.subr.mxu0 0.0
  %637 = vmatpush1.msra.mxu0 0.0
  %638 = vmatprep.subr.mxu0 0.0
  %639 = vmatpush1.msra.mxu0 0.0
  %640 = vmatprep.subr.mxu0 0.0
  %641 = vmatpush1.msra.mxu0 0.0
  %642 = vmatprep.subr.mxu0 0.0
  %643 = vmatpush1.msra.mxu0 0.0
  %644 = vmatprep.subr.mxu0 0.0
  %645 = vmatpush1.msra.mxu0 0.0
  %646 = vmatprep.subr.mxu0 0.0
  %647 = vmatpush1.msra.mxu0 0.0
  %648 = vmatprep.subr.mxu0 0.0
  %649 = vmatpush1.msra.mxu0 0.0
  %650 = vmatprep.subr.mxu0 0.0
  %651 = vmatpush1.msra.mxu0 0.0
  %652 = vmatprep.subr.mxu0 0.0
  %653 = vmatpush1.msra.mxu0 0.0
  %654 = vmatprep.subr.mxu0 0.0
  %655 = vmatpush1.msra.mxu0 0.0
  %656 = vmatprep.subr.mxu0 0.0
  %657 = vmatpush1.msra.mxu0 0.0
  %658 = vmatprep.subr.mxu0 0.0
  %659 = vmatpush1.msra.mxu0 0.0
  %660 = vmatprep.subr.mxu0 0.0
  %661 = vmatpush1.msra.mxu0 0.0
  %662 = vmatprep.subr.mxu0 0.0
  %663 = vmatpush1.msra.mxu0 0.0
  %664 = vmatprep.subr.mxu0 0.0
  %665 = vmatpush1.msra.mxu0 0.0
  %666 = vmatprep.mubr.f32.mxu0 0.0
  %667 = vmatmul.mubr.f32.gmra.mrb[0].mxu0 %v600
  %v668 = vpop.f32.mrb[0].mxu0
  %v669 = vadd.f32 0.0, %v668
  %v670 = vpop.f32.mrb[0].mxu0
  %671 = vdwg.mxu0
  %v673 = vsel %vm598, %v501, 0
  %675 = vmatprep.subr.mxu0 0.0
  %676 = vmatpush1.msra.mxu0 %v590
  %677 = vmatprep.subr.mxu0 0.0
  %678 = vmatpush1.msra.mxu0 %v591
  %679 = vmatprep.subr.mxu0 0.0
  %680 = vmatpush1.msra.mxu0 %v592
  %681 = vmatprep.subr.mxu0 0.0
  %682 = vmatpush1.msra.mxu0 %v593
  %683 = vmatprep.subr.mxu0 0.0
  %684 = vmatpush1.msra.mxu0 0.0
  %685 = vmatprep.subr.mxu0 0.0
  %686 = vmatpush1.msra.mxu0 0.0
  %687 = vmatprep.subr.mxu0 0.0
  %688 = vmatpush1.msra.mxu0 0.0
  %689 = vmatprep.subr.mxu0 0.0
  %690 = vmatpush1.msra.mxu0 0.0
  %691 = vmatprep.subr.mxu0 0.0
  %692 = vmatpush1.msra.mxu0 0.0
  %693 = vmatprep.subr.mxu0 0.0
  %694 = vmatpush1.msra.mxu0 0.0
  %695 = vmatprep.subr.mxu0 0.0
  %696 = vmatpush1.msra.mxu0 0.0
  %697 = vmatprep.subr.mxu0 0.0
  %698 = vmatpush1.msra.mxu0 0.0
  %699 = vmatprep.subr.mxu0 0.0
  %700 = vmatpush1.msra.mxu0 0.0
  %701 = vmatprep.subr.mxu0 0.0
  %702 = vmatpush1.msra.mxu0 0.0
  %703 = vmatprep.subr.mxu0 0.0
  %704 = vmatpush1.msra.mxu0 0.0
  %705 = vmatprep.subr.mxu0 0.0
  %706 = vmatpush1.msra.mxu0 0.0
  %707 = vmatprep.subr.mxu0 0.0
  %708 = vmatpush1.msra.mxu0 0.0
  %709 = vmatprep.subr.mxu0 0.0
  %710 = vmatpush1.msra.mxu0 0.0
  %711 = vmatprep.subr.mxu0 0.0
  %712 = vmatpush1.msra.mxu0 0.0
  %713 = vmatprep.subr.mxu0 0.0
  %714 = vmatpush1.msra.mxu0 0.0
  %715 = vmatprep.subr.mxu0 0.0
  %716 = vmatpush1.msra.mxu0 0.0
  %717 = vmatprep.subr.mxu0 0.0
  %718 = vmatpush1.msra.mxu0 0.0
  %719 = vmatprep.subr.mxu0 0.0
  %720 = vmatpush1.msra.mxu0 0.0
  %721 = vmatprep.subr.mxu0 0.0
  %722 = vmatpush1.msra.mxu0 0.0
  %723 = vmatprep.subr.mxu0 0.0
  %724 = vmatpush1.msra.mxu0 0.0
  %725 = vmatprep.subr.mxu0 0.0
  %726 = vmatpush1.msra.mxu0 0.0
  %727 = vmatprep.subr.mxu0 0.0
  %728 = vmatpush1.msra.mxu0 0.0
  %729 = vmatprep.subr.mxu0 0.0
  %730 = vmatpush1.msra.mxu0 0.0
  %731 = vmatprep.subr.mxu0 0.0
  %732 = vmatpush1.msra.mxu0 0.0
  %733 = vmatprep.subr.mxu0 0.0
  %734 = vmatpush1.msra.mxu0 0.0
  %735 = vmatprep.subr.mxu0 0.0
  %736 = vmatpush1.msra.mxu0 0.0
  %737 = vmatprep.subr.mxu0 0.0
  %738 = vmatpush1.msra.mxu0 0.0
  %739 = vmatprep.mubr.f32.mxu0 0.0
  %740 = vmatmul.mubr.f32.gmra.mrb[0].mxu0 %v673
  %v741 = vpop.f32.mrb[0].mxu0
  %v742 = vadd.f32 %v669, %v741
  %v743 = vpop.f32.mrb[0].mxu0
  %744 = vdwg.mxu0
  %v745 = vld [vmem:[%s8] sm:$0x1]
  %v747 = vlaneseq
  %v748 = vshrl.u32 %v747, 7
  %v749 = vsub.s32 0, %v748
  %v750 = vrot.slane %v745, %v749
  %v752 = vadd.f32 %v742, %v750
  %v753 = vmax.f32 %v752, 0.0
  %v754 = vld [vmem:[%s9] sm:$0x1]
  %v756 = vlaneseq
  %v757 = vshrl.u32 %v756, 7
  %v758 = vsub.s32 0, %v757
  %v759 = vrot.slane %v754, %v758
  %v761 = vmul.f32 %v753, %v759
  %vm762 = vcmask 254976
  %v763 = vsel %vm762, %v761, 0.0
  %764 = vadd.xlane.f32.xlu0 %v763
  %v765 = vpop.xlane.xlu0 %764
  %v766 = vld [vmem:[#allocation2] sm:$0x1]
  %v768 = vlaneseq
  %v769 = vshrl.u32 %v768, 7
  %v770 = vsub.s32 0, %v769
  %v771 = vrot.slane %v766, %v770
  %v773 = vadd.f32 %v765, %v771
  %vm774 = vcmask 1024
  %775 = vst.msk [vmem:[%s11] sm:$0x3] %vm774, %v773
  // Predicated region
  $region46: #{tpu_custom_call.1} parent=0 // pred_check
    _
  $region47: #{tpu_custom_call.1} parent=0 // pred_check_branch
    %777 = sbr.rel (0) target = $region49
  $region48: #{tpu_custom_call.1} parent=0 // pred_region
    _
  $region49: #{tpu_custom_call.1} parent=0 // pred_fallthru
    _
  // Predicated region
  $region50: #{tpu_custom_call.1} parent=0 // pred_check
    _
  $region51: #{tpu_custom_call.1} parent=0 // pred_check_branch
    %779 = sbr.rel (0) target = $region53
  $region52: #{tpu_custom_call.1} parent=0 // pred_region
    _
  $region53: #{tpu_custom_call.1} parent=0 // pred_fallthru
    _

</llo_original>
